<compile_context>
chip_gen: v7x
topology: tpu7x:2x2x1
jax: 0.10.0
libtpu: 0.0.40
codegen_flags: <defaults>
</compile_context>

<pallas_src>
import functools

import jax
import jax.numpy as jnp
from jax import lax
from jax.experimental import pallas as pl
from jax.experimental.pallas import tpu as pltpu

LATENT_DIM = 32
HIDDEN = 512
BN_EPS = 1e-5
NEG_SLOPE = 0.2


def _leaky_relu(x, slope=NEG_SLOPE):
    return jnp.where(x >= 0, x, slope * x)


def _round_up(x, m):
    return ((x + m - 1) // m) * m


def _front_mlp(z_ref, w1_ref, b1_ref, w2_ref, b2_ref):
    """h2 = LeakyReLU(z @ W1 + b1) @ W2 + b2  (bf16 matmuls, f32 accum)."""
    z = z_ref[...]
    h1 = jnp.dot(z.astype(jnp.bfloat16), w1_ref[...],
                 preferred_element_type=jnp.float32) + b1_ref[...]
    h1 = _leaky_relu(h1)
    h2 = jnp.dot(h1.astype(jnp.bfloat16), w2_ref[...],
                 preferred_element_type=jnp.float32) + b2_ref[...]
    return h2                                                          # (TB, H) f32


def _bn_tail(h2, mean, inv_std, gamma_ref, beta_ref, w3_ref, b3_ref, out_ref):
    """BN-normalize, LeakyReLU, lane-dense transposed 512->1 projection, sigmoid."""
    h2n = (h2 - mean) * inv_std * gamma_ref[...] + beta_ref[...]
    h3 = _leaky_relu(h2n)
    # (1, H) @ (H, TB) -> (1, TB): lane-dense output row (q @ k.T pattern).
    logits = jnp.dot(w3_ref[...], h3.astype(jnp.bfloat16).T,
                     preferred_element_type=jnp.float32) + b3_ref[...]
    out_ref[...] = jax.nn.sigmoid(logits)                              # (1, TB)


# ---------------------------------------------------------------------------
# Kernel A (multi-tile phase 1): masked per-tile BN partials only (no h2 to HBM)
# ---------------------------------------------------------------------------
def _stats_kernel(z_ref, w1_ref, b1_ref, w2_ref, b2_ref, stats_ref, *, tb, batch):
    i = pl.program_id(0)
    h2 = _front_mlp(z_ref, w1_ref, b1_ref, w2_ref, b2_ref)
    row = i * tb + lax.broadcasted_iota(jnp.int32, (tb, 1), 0)
    h2m = jnp.where(row < batch, h2, 0.0)                  # padded rows excluded
    psum = jnp.sum(h2m, axis=0, keepdims=True)             # (1, H)
    psumsq = jnp.sum(h2m * h2m, axis=0, keepdims=True)     # (1, H)
    stats_ref[...] = jnp.concatenate([psum, psumsq], axis=0)[None]   # (1, 2, H)


# ---------------------------------------------------------------------------
# Kernel B (multi-tile phase 2): recompute h2, reduce partials in-kernel, BN,
# LeakyReLU, transposed lane-dense final Linear + Sigmoid.
# ---------------------------------------------------------------------------
def _tail_kernel(z_ref, w1_ref, b1_ref, w2_ref, b2_ref, stats_ref,
                 gamma_ref, beta_ref, w3_ref, b3_ref, out_ref, *, batch):
    h2 = _front_mlp(z_ref, w1_ref, b1_ref, w2_ref, b2_ref)
    p = stats_ref[...]                                      # (nt, 2, H)
    s = jnp.sum(p[:, 0, :], axis=0, keepdims=True)          # (1, H)
    sq = jnp.sum(p[:, 1, :], axis=0, keepdims=True)         # (1, H)
    inv_b = 1.0 / batch
    mean = s * inv_b
    var = jnp.maximum(sq * inv_b - mean * mean, 0.0)        # biased, clamped
    inv_std = lax.rsqrt(var + BN_EPS)
    _bn_tail(h2, mean, inv_std, gamma_ref, beta_ref, w3_ref, b3_ref, out_ref)


# ---------------------------------------------------------------------------
# Kernel C (fast path, nt == 1): everything in one pallas_call.
# ---------------------------------------------------------------------------
def _fused_kernel(z_ref, w1_ref, b1_ref, w2_ref, b2_ref,
                  gamma_ref, beta_ref, w3_ref, b3_ref, out_ref, *, tb, batch):
    h2 = _front_mlp(z_ref, w1_ref, b1_ref, w2_ref, b2_ref)
    row = lax.broadcasted_iota(jnp.int32, (tb, 1), 0)
    h2m = jnp.where(row < batch, h2, 0.0)
    inv_b = 1.0 / batch
    mean = jnp.sum(h2m, axis=0, keepdims=True) * inv_b
    var = jnp.maximum(jnp.sum(h2m * h2m, axis=0, keepdims=True) * inv_b
                      - mean * mean, 0.0)
    inv_std = lax.rsqrt(var + BN_EPS)
    _bn_tail(h2, mean, inv_std, gamma_ref, beta_ref, w3_ref, b3_ref, out_ref)


def discriminator_forward(z, params):
    w1, b1, w2, b2, gamma, beta, w3, b3 = params
    B, L = z.shape
    H = w1.shape[1]

    # Batch tiling: 512-row tiles (measured ~85% of HBM roofline vs ~63% at 256),
    # shrunk to the padded batch for small inputs so B <= 512 takes the fused path.
    TB = min(512, _round_up(B, 8))
    Bp = _round_up(B, TB)
    nt = Bp // TB
    if Bp != B:
        z = jnp.pad(z, ((0, Bp - B), (0, 0)))

    # bf16 weights: halves dominant weight HBM traffic; f32 accumulation in-kernel.
    w1b = w1.astype(jnp.bfloat16)
    w2b = w2.astype(jnp.bfloat16)
    w3row = w3.reshape(1, H).astype(jnp.bfloat16)     # (1, H) — no 128-lane padding
    b3v = b3.reshape(1, 1).astype(jnp.float32)        # (1, 1)

    def const_spec(shape):
        zeros = (0,) * len(shape)
        return pl.BlockSpec(shape, lambda i: zeros)

    weight_specs = [
        const_spec((L, H)), const_spec((1, H)),       # W1, b1 (VMEM-resident)
        const_spec((H, H)), const_spec((1, H)),       # W2, b2 (VMEM-resident)
    ]
    bn_out_specs = [
        const_spec((1, H)), const_spec((1, H)),       # gamma, beta
        const_spec((1, H)), const_spec((1, 1)),       # w3 row, b3
    ]
    z_spec = pl.BlockSpec((TB, L), lambda i: (i, 0))
    out_spec = pl.BlockSpec((1, TB), lambda i: (i, 0))

    if nt == 1:
        # ---- single-kernel fast path (B <= 512) -----------------------------
        out = pl.pallas_call(
            functools.partial(_fused_kernel, tb=TB, batch=B),
            grid=(1,),
            out_shape=jax.ShapeDtypeStruct((1, TB), jnp.float32),
            in_specs=[z_spec] + weight_specs + bn_out_specs,
            out_specs=out_spec,
            compiler_params=pltpu.CompilerParams(
                dimension_semantics=("arbitrary",)),
        )(z, w1b, b1, w2b, b2, gamma, beta, w3row, b3v)
        return out.reshape(Bp, 1)[:B]

    # "parallel" only when there are enough tiles to amortize duplicated
    # resident-weight DMA across v7x's two TensorCores.
    sem = "parallel" if nt >= 4 else "arbitrary"

    # ---- phase 1: masked partial BN statistics (no h2 intermediate) ---------
    stats = pl.pallas_call(
        functools.partial(_stats_kernel, tb=TB, batch=B),
        grid=(nt,),
        out_shape=jax.ShapeDtypeStruct((nt, 2, H), jnp.float32),
        in_specs=[z_spec] + weight_specs,
        out_specs=pl.BlockSpec((1, 2, H), lambda i: (i, 0, 0)),
        compiler_params=pltpu.CompilerParams(dimension_semantics=(sem,)),
    )(z, w1b, b1, w2b, b2)

    # ---- phase 2: recompute h2, in-kernel global stats reduce, BN + tail ----
    out = pl.pallas_call(
        functools.partial(_tail_kernel, batch=B),
        grid=(nt,),
        out_shape=jax.ShapeDtypeStruct((nt, TB), jnp.float32),
        in_specs=[z_spec] + weight_specs + [const_spec((nt, 2, H))] + bn_out_specs,
        out_specs=out_spec,
        compiler_params=pltpu.CompilerParams(dimension_semantics=(sem,)),
    )(z, w1b, b1, w2b, b2, stats, gamma, beta, w3row, b3v)

    return out.reshape(Bp, 1)[:B]


def init_params(key):
    """Deterministic init mirroring nn.Linear defaults (U[-1/sqrt(fan_in), ...])."""
    k1, k2, k3, k4, k5, k6 = jax.random.split(key, 6)

    def linear(kw, kb, fan_in, fan_out):
        bound = 1.0 / jnp.sqrt(fan_in)
        w = jax.random.uniform(kw, (fan_in, fan_out), jnp.float32, -bound, bound)
        b = jax.random.uniform(kb, (1, fan_out), jnp.float32, -bound, bound)
        return w, b

    w1, b1 = linear(k1, k2, LATENT_DIM, HIDDEN)
    w2, b2 = linear(k3, k4, HIDDEN, HIDDEN)
    w3, b3 = linear(k5, k6, HIDDEN, 1)
    gamma = jnp.ones((1, HIDDEN), jnp.float32)   # BatchNorm1d weight init
    beta = jnp.zeros((1, HIDDEN), jnp.float32)   # BatchNorm1d bias init
    return (w1, b1, w2, b2, gamma, beta, w3, b3)


def reference_forward(z, params):
    """Pure-JAX reference matching the kernel's bf16-weight / f32-accum matmuls."""
    w1, b1, w2, b2, gamma, beta, w3, b3 = params

    def mm(x, w):
        return jnp.dot(x.astype(jnp.bfloat16), w.astype(jnp.bfloat16),
                       preferred_element_type=jnp.float32)

    h1 = _leaky_relu(mm(z, w1) + b1)
    h2 = mm(h1, w2) + b2
    mean = h2.mean(0, keepdims=True)
    var = ((h2 - mean) ** 2).mean(0, keepdims=True)   # biased (training-mode)
    h2n = (h2 - mean) * lax.rsqrt(var + BN_EPS) * gamma + beta
    h3 = _leaky_relu(h2n)
    return jax.nn.sigmoid(mm(h3, w3) + b3)


if __name__ == "__main__":
    key = jax.random.PRNGKey(0)
    kz, kp = jax.random.split(key)
    params = init_params(kp)

    fwd = jax.jit(discriminator_forward)

    # B=8   : fused single-kernel path, tiny tile.
    # B=300 : fused path with batch padding + masked BN stats.
    # B=1100: multi-tile two-kernel path ("arbitrary", nt=3) + padding.
    # B=2500: multi-tile path with "parallel" semantics (nt=5).
    for B in (8, 300, 1100, 2500):
        z = jax.random.normal(jax.random.fold_in(kz, B), (B, LATENT_DIM), jnp.float32)
        out = jax.block_until_ready(fwd(z, params))
        ref = reference_forward(z, params)
        assert out.shape == (B, 1), out.shape
        err = float(jnp.max(jnp.abs(out - ref)))
        assert jnp.allclose(out, ref, atol=5e-3, rtol=1e-3), (B, err)

    print("KERNEL_OK")
</pallas_src>

<mosaic_0001>
module attributes {stable_mosaic.version = 11 : i64} {
  func.func @_fused_kernel(%arg0: i32, %arg1: memref<8x32xf32, #tpu.memory_space<vmem>>, %arg2: memref<32x512xbf16, #tpu.memory_space<vmem>>, %arg3: memref<1x512xf32, #tpu.memory_space<vmem>>, %arg4: memref<512x512xbf16, #tpu.memory_space<vmem>>, %arg5: memref<1x512xf32, #tpu.memory_space<vmem>>, %arg6: memref<1x512xf32, #tpu.memory_space<vmem>>, %arg7: memref<1x512xf32, #tpu.memory_space<vmem>>, %arg8: memref<1x512xbf16, #tpu.memory_space<vmem>>, %arg9: memref<1x1xf32, #tpu.memory_space<vmem>>, %arg10: memref<1x8xf32, #tpu.memory_space<vmem>>) attributes {dimension_semantics = [#tpu.dimension_semantics<arbitrary>], iteration_bounds = array<i64: 1>, scalar_prefetch = 0 : i64, scratch_operands = 0 : i64, tpu.core_type = #tpu.core_type<tc>, window_params = [{transform_indices = @transform_0, window_bounds = array<i64: 8, 32>}, {pipeline_mode = #tpu.pipeline_mode<synchronous>, transform_indices = @transform_1, window_bounds = array<i64: 32, 512>}, {pipeline_mode = #tpu.pipeline_mode<synchronous>, transform_indices = @transform_2, window_bounds = array<i64: 1, 512>}, {pipeline_mode = #tpu.pipeline_mode<synchronous>, transform_indices = @transform_3, window_bounds = array<i64: 512, 512>}, {pipeline_mode = #tpu.pipeline_mode<synchronous>, transform_indices = @transform_4, window_bounds = array<i64: 1, 512>}, {pipeline_mode = #tpu.pipeline_mode<synchronous>, transform_indices = @transform_5, window_bounds = array<i64: 1, 512>}, {pipeline_mode = #tpu.pipeline_mode<synchronous>, transform_indices = @transform_6, window_bounds = array<i64: 1, 512>}, {pipeline_mode = #tpu.pipeline_mode<synchronous>, transform_indices = @transform_7, window_bounds = array<i64: 1, 512>}, {pipeline_mode = #tpu.pipeline_mode<synchronous>, transform_indices = @transform_8, window_bounds = array<i64: 1, 1>}, {transform_indices = @transform_9, window_bounds = array<i64: 1, 8>}]} {
    %c0 = arith.constant 0 : index
    %c0_0 = arith.constant 0 : index
    %0 = vector.load %arg1[%c0, %c0_0] : memref<8x32xf32, #tpu.memory_space<vmem>>, vector<8x32xf32>
    %1 = arith.truncf %0 : vector<8x32xf32> to vector<8x32xbf16>
    %c0_1 = arith.constant 0 : index
    %c0_2 = arith.constant 0 : index
    %2 = vector.load %arg2[%c0_1, %c0_2] : memref<32x512xbf16, #tpu.memory_space<vmem>>, vector<32x512xbf16>
    %cst = arith.constant dense<0.000000e+00> : vector<8x512xf32>
    %3 = tpu.matmul %1, %2, %cst {dimension_numbers = #tpu.dot_dimension_numbers<[1], [0], [0], [1], [0, 0, 1, 1], [], []>} : vector<8x32xbf16>, vector<32x512xbf16>, vector<8x512xf32> -> vector<8x512xf32>
    %c0_3 = arith.constant 0 : index
    %c0_4 = arith.constant 0 : index
    %4 = vector.load %arg3[%c0_3, %c0_4] : memref<1x512xf32, #tpu.memory_space<vmem>>, vector<1x512xf32>
    %5 = vector.broadcast %4 : vector<1x512xf32> to vector<8x512xf32>
    %6 = arith.addf %3, %5 : vector<8x512xf32>
    %cst_5 = arith.constant 0.000000e+00 : f32
    %7 = vector.broadcast %cst_5 : f32 to vector<8x512xf32>
    %8 = arith.cmpf oge, %6, %7 : vector<8x512xf32>
    %cst_6 = arith.constant 2.000000e-01 : f32
    %9 = vector.broadcast %cst_6 : f32 to vector<8x512xf32>
    %10 = arith.mulf %9, %6 : vector<8x512xf32>
    %11 = arith.select %8, %6, %10 : vector<8x512xi1>, vector<8x512xf32>
    %12 = arith.truncf %11 : vector<8x512xf32> to vector<8x512xbf16>
    %c0_7 = arith.constant 0 : index
    %c0_8 = arith.constant 0 : index
    %13 = vector.load %arg4[%c0_7, %c0_8] : memref<512x512xbf16, #tpu.memory_space<vmem>>, vector<512x512xbf16>
    %cst_9 = arith.constant dense<0.000000e+00> : vector<8x512xf32>
    %14 = tpu.matmul %12, %13, %cst_9 {dimension_numbers = #tpu.dot_dimension_numbers<[1], [0], [0], [1], [0, 0, 1, 1], [], []>} : vector<8x512xbf16>, vector<512x512xbf16>, vector<8x512xf32> -> vector<8x512xf32>
    %c0_10 = arith.constant 0 : index
    %c0_11 = arith.constant 0 : index
    %15 = vector.load %arg5[%c0_10, %c0_11] : memref<1x512xf32, #tpu.memory_space<vmem>>, vector<1x512xf32>
    %16 = vector.broadcast %15 : vector<1x512xf32> to vector<8x512xf32>
    %17 = arith.addf %14, %16 : vector<8x512xf32>
    %18 = tpu.iota {dimensions = array<i32: 0>} : vector<8x1xi32>
    %c8_i32 = arith.constant 8 : i32
    %19 = vector.broadcast %c8_i32 : i32 to vector<8x1xi32>
    %20 = arith.cmpi slt, %18, %19 : vector<8x1xi32>
    %cst_12 = arith.constant 0.000000e+00 : f32
    %21 = vector.shape_cast %20 : vector<8x1xi1> to vector<8x1xi1>
    %22 = vector.broadcast %21 : vector<8x1xi1> to vector<8x512xi1>
    %23 = vector.broadcast %cst_12 : f32 to vector<8x512xf32>
    %24 = arith.select %22, %17, %23 : vector<8x512xi1>, vector<8x512xf32>
    %cst_13 = arith.constant dense<0.000000e+00> : vector<512xf32>
    %25 = vector.multi_reduction <add>, %24, %cst_13 [0] : vector<8x512xf32> to vector<512xf32>
    %26 = vector.shape_cast %25 : vector<512xf32> to vector<1x512xf32>
    %cst_14 = arith.constant 1.250000e-01 : f32
    %27 = vector.broadcast %cst_14 : f32 to vector<1x512xf32>
    %28 = arith.mulf %26, %27 : vector<1x512xf32>
    %29 = arith.mulf %24, %24 : vector<8x512xf32>
    %cst_15 = arith.constant dense<0.000000e+00> : vector<512xf32>
    %30 = vector.multi_reduction <add>, %29, %cst_15 [0] : vector<8x512xf32> to vector<512xf32>
    %31 = vector.shape_cast %30 : vector<512xf32> to vector<1x512xf32>
    %cst_16 = arith.constant 1.250000e-01 : f32
    %32 = vector.broadcast %cst_16 : f32 to vector<1x512xf32>
    %33 = arith.mulf %31, %32 : vector<1x512xf32>
    %34 = arith.mulf %28, %28 : vector<1x512xf32>
    %35 = arith.subf %33, %34 : vector<1x512xf32>
    %cst_17 = arith.constant 0.000000e+00 : f32
    %36 = vector.broadcast %cst_17 : f32 to vector<1x512xf32>
    %37 = arith.maximumf %35, %36 : vector<1x512xf32>
    %cst_18 = arith.constant 9.99999974E-6 : f32
    %38 = vector.broadcast %cst_18 : f32 to vector<1x512xf32>
    %39 = arith.addf %37, %38 : vector<1x512xf32>
    %40 = math.rsqrt %39 : vector<1x512xf32>
    %41 = vector.broadcast %28 : vector<1x512xf32> to vector<8x512xf32>
    %42 = arith.subf %17, %41 : vector<8x512xf32>
    %43 = vector.broadcast %40 : vector<1x512xf32> to vector<8x512xf32>
    %44 = arith.mulf %42, %43 : vector<8x512xf32>
    %c0_19 = arith.constant 0 : index
    %c0_20 = arith.constant 0 : index
    %45 = vector.load %arg6[%c0_19, %c0_20] : memref<1x512xf32, #tpu.memory_space<vmem>>, vector<1x512xf32>
    %46 = vector.broadcast %45 : vector<1x512xf32> to vector<8x512xf32>
    %47 = arith.mulf %44, %46 : vector<8x512xf32>
    %c0_21 = arith.constant 0 : index
    %c0_22 = arith.constant 0 : index
    %48 = vector.load %arg7[%c0_21, %c0_22] : memref<1x512xf32, #tpu.memory_space<vmem>>, vector<1x512xf32>
    %49 = vector.broadcast %48 : vector<1x512xf32> to vector<8x512xf32>
    %50 = arith.addf %47, %49 : vector<8x512xf32>
    %cst_23 = arith.constant 0.000000e+00 : f32
    %51 = vector.broadcast %cst_23 : f32 to vector<8x512xf32>
    %52 = arith.cmpf oge, %50, %51 : vector<8x512xf32>
    %cst_24 = arith.constant 2.000000e-01 : f32
    %53 = vector.broadcast %cst_24 : f32 to vector<8x512xf32>
    %54 = arith.mulf %53, %50 : vector<8x512xf32>
    %55 = arith.select %52, %50, %54 : vector<8x512xi1>, vector<8x512xf32>
    %c0_25 = arith.constant 0 : index
    %c0_26 = arith.constant 0 : index
    %56 = vector.load %arg8[%c0_25, %c0_26] : memref<1x512xbf16, #tpu.memory_space<vmem>>, vector<1x512xbf16>
    %57 = arith.truncf %55 : vector<8x512xf32> to vector<8x512xbf16>
    %58 = tpu.transpose %57, [1, 0] : vector<8x512xbf16> -> vector<512x8xbf16>
    %cst_27 = arith.constant dense<0.000000e+00> : vector<1x8xf32>
    %59 = tpu.matmul %56, %58, %cst_27 {dimension_numbers = #tpu.dot_dimension_numbers<[1], [0], [0], [1], [0, 0, 1, 1], [], []>} : vector<1x512xbf16>, vector<512x8xbf16>, vector<1x8xf32> -> vector<1x8xf32>
    %c0_28 = arith.constant 0 : index
    %c0_29 = arith.constant 0 : index
    %60 = vector.load %arg9[%c0_28, %c0_29] : memref<1x1xf32, #tpu.memory_space<vmem>>, vector<1x1xf32>
    %61 = vector.broadcast %60 : vector<1x1xf32> to vector<1x8xf32>
    %62 = arith.addf %59, %61 : vector<1x8xf32>
    %63 = arith.negf %62 : vector<1x8xf32>
    %64 = math.exp %63 : vector<1x8xf32>
    %cst_30 = arith.constant 1.000000e+00 : f32
    %65 = vector.broadcast %cst_30 : f32 to vector<1x8xf32>
    %66 = arith.addf %65, %64 : vector<1x8xf32>
    %67 = arith.divf %65, %66 : vector<1x8xf32>
    %c0_31 = arith.constant 0 : index
    %c0_32 = arith.constant 0 : index
    %68 = vector.load %arg10[%c0_31, %c0_32] : memref<1x8xf32, #tpu.memory_space<vmem>>, vector<1x8xf32>
    tpu.vector_store %arg10[%c0_31, %c0_32], %67 {strides = array<i32>} : memref<1x8xf32, #tpu.memory_space<vmem>>, vector<1x8xf32>,
    return
  }
  func.func @transform_0(%arg0: i32) -> (i32, i32) {
    %c0_i32 = arith.constant 0 : i32
    %c0_i32_0 = arith.constant 0 : i32
    return %arg0, %c0_i32 : i32, i32
  }
  func.func @transform_1(%arg0: i32) -> (i32, i32) {
    %c0_i32 = arith.constant 0 : i32
    %c0_i32_0 = arith.constant 0 : i32
    %c0_i32_1 = arith.constant 0 : i32
    return %c0_i32, %c0_i32_0 : i32, i32
  }
  func.func @transform_2(%arg0: i32) -> (i32, i32) {
    %c0_i32 = arith.constant 0 : i32
    %c0_i32_0 = arith.constant 0 : i32
    %c0_i32_1 = arith.constant 0 : i32
    return %c0_i32, %c0_i32_0 : i32, i32
  }
  func.func @transform_3(%arg0: i32) -> (i32, i32) {
    %c0_i32 = arith.constant 0 : i32
    %c0_i32_0 = arith.constant 0 : i32
    %c0_i32_1 = arith.constant 0 : i32
    return %c0_i32, %c0_i32_0 : i32, i32
  }
  func.func @transform_4(%arg0: i32) -> (i32, i32) {
    %c0_i32 = arith.constant 0 : i32
    %c0_i32_0 = arith.constant 0 : i32
    %c0_i32_1 = arith.constant 0 : i32
    return %c0_i32, %c0_i32_0 : i32, i32
  }
  func.func @transform_5(%arg0: i32) -> (i32, i32) {
    %c0_i32 = arith.constant 0 : i32
    %c0_i32_0 = arith.constant 0 : i32
    %c0_i32_1 = arith.constant 0 : i32
    return %c0_i32, %c0_i32_0 : i32, i32
  }
  func.func @transform_6(%arg0: i32) -> (i32, i32) {
    %c0_i32 = arith.constant 0 : i32
    %c0_i32_0 = arith.constant 0 : i32
    %c0_i32_1 = arith.constant 0 : i32
    return %c0_i32, %c0_i32_0 : i32, i32
  }
  func.func @transform_7(%arg0: i32) -> (i32, i32) {
    %c0_i32 = arith.constant 0 : i32
    %c0_i32_0 = arith.constant 0 : i32
    %c0_i32_1 = arith.constant 0 : i32
    return %c0_i32, %c0_i32_0 : i32, i32
  }
  func.func @transform_8(%arg0: i32) -> (i32, i32) {
    %c0_i32 = arith.constant 0 : i32
    %c0_i32_0 = arith.constant 0 : i32
    %c0_i32_1 = arith.constant 0 : i32
    return %c0_i32, %c0_i32_0 : i32, i32
  }
  func.func @transform_9(%arg0: i32) -> (i32, i32) {
    %c0_i32 = arith.constant 0 : i32
    %c0_i32_0 = arith.constant 0 : i32
    return %arg0, %c0_i32 : i32, i32
  }
}

</mosaic_0001>

<llo_original>
// kernel: discriminator_forward.1
$region0: #{discriminator_forward.1}
  #allocation0 [shape = 'u32[]', space=smem, size = 0x4, offset = 0x4, fixed_abs, tag = 'smem constant byte address 0x4 - core index']
  #allocation1 [shape = 'u32[144,128]{1,0:T(1,128)}', space=vmem, size = 0x12000, scoped, tag = 'internal scratch']
  #allocation2 [shape = 'f32[1,1]{1,0:T(1,128)S(1)}', space=vmem, size = 0x200, scoped, tag = 'scoped memory for discriminator_forward.1']
  %s0 = inlined_call_operand.vmem [shape: f32[8,32], index: 0, kind: input, shape index: {}]
  %s1 = inlined_call_operand.vmem [shape: bf16[32,512], index: 1, kind: input, shape index: {}]
  %s2 = inlined_call_operand.vmem [shape: f32[1,512], index: 2, kind: input, shape index: {}]
  %s3 = inlined_call_operand.vmem [shape: bf16[512,512], index: 3, kind: input, shape index: {}]
  %s4 = inlined_call_operand.vmem [shape: f32[1,512], index: 4, kind: input, shape index: {}]
  %s5 = inlined_call_operand.vmem [shape: f32[1,512], index: 5, kind: input, shape index: {}]
  %s6 = inlined_call_operand.vmem [shape: f32[1,512], index: 6, kind: input, shape index: {}]
  %s7 = inlined_call_operand.vmem [shape: bf16[1,512], index: 7, kind: input, shape index: {}]
  %s8 = inlined_call_operand.<no memory space> [shape: f32[1,1], index: 8, kind: input, shape index: {}]
  %s9 = inlined_call_operand.hbm [shape: f32[1,8], index: 9, kind: output, shape index: {}]
  %s10 = sld [smem:[#allocation0]]
  $region46: #{discriminator_forward.1} parent=0
    _
  %s12 = ssub.s32 1, %s10
  %s13 = scalar_select 0, %s12, %s10
  %v14 = vstv %s8
  %15 = vst [vmem:[#allocation2] sm:$0x1] %v14
  $region1: #{discriminator_forward.1} parent=0
    #allocation3 [shape = 'u8[512]{0}', space=vmem, size = 0x400, scoped, tag = 'output window, operand 0, single buffered']
    #allocation4 [shape = 's32[1]{0}', space=sflag, size = 0x4, scoped, tag = 'scoped memory for discriminator_forward.1']
    %16 = vsyncpa [#allocation4], 0
    // Predicated region
    $region2: #{discriminator_forward.1} parent=1 // pred_check
      _
    $region3: #{discriminator_forward.1} parent=1 // pred_check_branch
      %18 = sbr.rel (0) target = $region5
    $region4: #{discriminator_forward.1} parent=1 // pred_region
      _
    $region5: #{discriminator_forward.1} parent=1 // pred_fallthru
      _
    // Predicated region
    $region6: #{discriminator_forward.1} parent=1 // pred_check
      _
    $region7: #{discriminator_forward.1} parent=1 // pred_check_branch
      %20 = sbr.rel (0) target = $region9
    $region8: #{discriminator_forward.1} parent=1 // pred_region
      _
    $region9: #{discriminator_forward.1} parent=1 // pred_fallthru
      _
    // Predicated region
    $region10: #{discriminator_forward.1} parent=1 // pred_check
      _
    $region11: #{discriminator_forward.1} parent=1 // pred_check_branch
      %22 = sbr.rel (0) target = $region13
    $region12: #{discriminator_forward.1} parent=1 // pred_region
      _
    $region13: #{discriminator_forward.1} parent=1 // pred_fallthru
      _
    // Predicated region
    $region14: #{discriminator_forward.1} parent=1 // pred_check
      _
    $region15: #{discriminator_forward.1} parent=1 // pred_check_branch
      %24 = sbr.rel (0) target = $region17
    $region16: #{discriminator_forward.1} parent=1 // pred_region
      _
    $region17: #{discriminator_forward.1} parent=1 // pred_fallthru
      _
    // Predicated region
    $region18: #{discriminator_forward.1} parent=1 // pred_check
      _
    $region19: #{discriminator_forward.1} parent=1 // pred_check_branch
      %26 = sbr.rel (0) target = $region21
    $region20: #{discriminator_forward.1} parent=1 // pred_region
      _
    $region21: #{discriminator_forward.1} parent=1 // pred_fallthru
      _
    // Predicated region
    $region22: #{discriminator_forward.1} parent=1 // pred_check
      _
    $region23: #{discriminator_forward.1} parent=1 // pred_check_branch
      %28 = sbr.rel (0) target = $region25
    $region24: #{discriminator_forward.1} parent=1 // pred_region
      _
    $region25: #{discriminator_forward.1} parent=1 // pred_fallthru
      _
    // Predicated region
    $region26: #{discriminator_forward.1} parent=1 // pred_check
      _
    $region27: #{discriminator_forward.1} parent=1 // pred_check_branch
      %30 = sbr.rel (0) target = $region29
    $region28: #{discriminator_forward.1} parent=1 // pred_region
      _
    $region29: #{discriminator_forward.1} parent=1 // pred_fallthru
      _
    // Predicated region
    $region30: #{discriminator_forward.1} parent=1 // pred_check
      _
    $region31: #{discriminator_forward.1} parent=1 // pred_check_branch
      %32 = sbr.rel (0) target = $region33
    $region32: #{discriminator_forward.1} parent=1 // pred_region
      _
    $region33: #{discriminator_forward.1} parent=1 // pred_fallthru
      _
    // Predicated region
    $region34: #{discriminator_forward.1} parent=1 // pred_check
      _
    $region35: #{discriminator_forward.1} parent=1 // pred_check_branch
      %34 = sbr.rel (0) target = $region37
    $region36: #{discriminator_forward.1} parent=1 // pred_region
      _
    $region37: #{discriminator_forward.1} parent=1 // pred_fallthru
      _
    %v36 = vld [vmem:[%s0] sm:$0xff]
    %v37 = vpack.c.bf16 %v36, %v36
    %v38 = vld [vmem:[%s1] sm:$0xff]
    %v39 = vld [vmem:[%s1 + $0x8] sm:$0xff]
    %v40 = vld [vmem:[%s1 + $0x10] sm:$0xff]
    %v41 = vld [vmem:[%s1 + $0x18] sm:$0xff]
    %v42 = vld [vmem:[%s1 + $0x20] sm:$0xff]
    %v43 = vld [vmem:[%s1 + $0x28] sm:$0xff]
    %v44 = vld [vmem:[%s1 + $0x30] sm:$0xff]
    %v45 = vld [vmem:[%s1 + $0x38] sm:$0xff]
    %v46 = vld [vmem:[%s2] sm:$0xf]
    %v48 = vlaneseq
    %v49 = vshrl.u32 %v48, 7
    %v50 = vsub.s32 0, %v49
    %v51 = vrot.slane %v46, %v50
    %v52 = vlaneseq
    %v53 = vshrl.u32 %v52, 7
    %v54 = vsub.s32 1, %v53
    %v55 = vrot.slane %v46, %v54
    %v56 = vlaneseq
    %v57 = vshrl.u32 %v56, 7
    %v58 = vsub.s32 2, %v57
    %v59 = vrot.slane %v46, %v58
    %v60 = vlaneseq
    %v61 = vshrl.u32 %v60, 7
    %v62 = vsub.s32 3, %v61
    %v63 = vrot.slane %v46, %v62
    %v76 = vunpack.c.l.b16 %v38
    %v77 = vunpack.c.h.b16 %v38
    %v78 = vunpack.c.l.b16 %v39
    %v79 = vunpack.c.h.b16 %v39
    %v80 = vunpack.c.l.b16 %v40
    %v81 = vunpack.c.h.b16 %v40
    %v82 = vunpack.c.l.b16 %v41
    %v83 = vunpack.c.h.b16 %v41
    %v84 = vunpack.c.l.b16 %v42
    %v85 = vunpack.c.h.b16 %v42
    %v86 = vunpack.c.l.b16 %v43
    %v87 = vunpack.c.h.b16 %v43
    %v88 = vunpack.c.l.b16 %v44
    %v89 = vunpack.c.h.b16 %v44
    %v90 = vunpack.c.l.b16 %v45
    %v91 = vunpack.c.h.b16 %v45
    %v92 = vpack.c.b16 %v80, %v76
    %v93 = vpack.c.b16 %v81, %v77
    %v94 = vpack.c.b16 %v82, %v78
    %v95 = vpack.c.b16 %v83, %v79
    %v96 = vpack.c.b16 %v88, %v84
    %v97 = vpack.c.b16 %v89, %v85
    %v98 = vpack.c.b16 %v90, %v86
    %v99 = vpack.c.b16 %v91, %v87
    %vm108 = vcmask 261120
    %v110 = vsel %vm108, %v37, 0
    %112 = vmatprep.subr.bf16.mxu0 %v93
    %113 = vmatpush1.bf16.msra.mxu0 %v92
    %114 = vmatprep.subr.bf16.mxu0 %v97
    %115 = vmatpush1.bf16.msra.mxu0 %v96
    %116 = vmatprep.subr.bf16.mxu0 0
    %117 = vmatpush1.bf16.msra.mxu0 0
    %118 = vmatprep.subr.bf16.mxu0 0
    %119 = vmatpush1.bf16.msra.mxu0 0
    %120 = vmatprep.subr.bf16.mxu0 0
    %121 = vmatpush1.bf16.msra.mxu0 0
    %122 = vmatprep.subr.bf16.mxu0 0
    %123 = vmatpush1.bf16.msra.mxu0 0
    %124 = vmatprep.subr.bf16.mxu0 0
    %125 = vmatpush1.bf16.msra.mxu0 0
    %126 = vmatprep.subr.bf16.mxu0 0
    %127 = vmatpush1.bf16.msra.mxu0 0
    %128 = vmatprep.subr.bf16.mxu0 0
    %129 = vmatpush1.bf16.msra.mxu0 0
    %130 = vmatprep.subr.bf16.mxu0 0
    %131 = vmatpush1.bf16.msra.mxu0 0
    %132 = vmatprep.subr.bf16.mxu0 0
    %133 = vmatpush1.bf16.msra.mxu0 0
    %134 = vmatprep.subr.bf16.mxu0 0
    %135 = vmatpush1.bf16.msra.mxu0 0
    %136 = vmatprep.subr.bf16.mxu0 0
    %137 = vmatpush1.bf16.msra.mxu0 0
    %138 = vmatprep.subr.bf16.mxu0 0
    %139 = vmatpush1.bf16.msra.mxu0 0
    %140 = vmatprep.subr.bf16.mxu0 0
    %141 = vmatpush1.bf16.msra.mxu0 0
    %142 = vmatprep.subr.bf16.mxu0 0
    %143 = vmatpush1.bf16.msra.mxu0 0
    %144 = vmatprep.mubr.bf16.mxu0 0
    %145 = vmatmul.mubr.bf16.gmra.mrb[0].mxu0 %v110
    %v146 = vpop.f32.mrb[0].mxu0
    %v147 = vadd.f32 %v51, %v146
    %v148 = vpop.f32.mrb[0].mxu0
    %v149 = vadd.f32 %v55, %v148
    %v150 = vpop.f32.mrb[0].mxu0
    %v151 = vpop.f32.mrb[0].mxu0
    %152 = vdwg.mxu0
    %153 = vmatprep.subr.bf16.mxu0 %v95
    %154 = vmatpush1.bf16.msra.mxu0 %v94
    %155 = vmatprep.subr.bf16.mxu0 %v99
    %156 = vmatpush1.bf16.msra.mxu0 %v98
    %157 = vmatprep.subr.bf16.mxu0 0
    %158 = vmatpush1.bf16.msra.mxu0 0
    %159 = vmatprep.subr.bf16.mxu0 0
    %160 = vmatpush1.bf16.msra.mxu0 0
    %161 = vmatprep.subr.bf16.mxu0 0
    %162 = vmatpush1.bf16.msra.mxu0 0
    %163 = vmatprep.subr.bf16.mxu0 0
    %164 = vmatpush1.bf16.msra.mxu0 0
    %165 = vmatprep.subr.bf16.mxu0 0
    %166 = vmatpush1.bf16.msra.mxu0 0
    %167 = vmatprep.subr.bf16.mxu0 0
    %168 = vmatpush1.bf16.msra.mxu0 0
    %169 = vmatprep.subr.bf16.mxu0 0
    %170 = vmatpush1.bf16.msra.mxu0 0
    %171 = vmatprep.subr.bf16.mxu0 0
    %172 = vmatpush1.bf16.msra.mxu0 0
    %173 = vmatprep.subr.bf16.mxu0 0
    %174 = vmatpush1.bf16.msra.mxu0 0
    %175 = vmatprep.subr.bf16.mxu0 0
    %176 = vmatpush1.bf16.msra.mxu0 0
    %177 = vmatprep.subr.bf16.mxu0 0
    %178 = vmatpush1.bf16.msra.mxu0 0
    %179 = vmatprep.subr.bf16.mxu0 0
    %180 = vmatpush1.bf16.msra.mxu0 0
    %181 = vmatprep.subr.bf16.mxu0 0
    %182 = vmatpush1.bf16.msra.mxu0 0
    %183 = vmatprep.subr.bf16.mxu0 0
    %184 = vmatpush1.bf16.msra.mxu0 0
    %185 = vmatprep.mubr.bf16.mxu0 0
    %186 = vmatmul.mubr.bf16.gmra.mrb[0].mxu0 %v110
    %v187 = vpop.f32.mrb[0].mxu0
    %v188 = vadd.f32 %v59, %v187
    %v189 = vpop.f32.mrb[0].mxu0
    %v190 = vadd.f32 %v63, %v189
    %v191 = vpop.f32.mrb[0].mxu0
    %v192 = vpop.f32.mrb[0].mxu0
    %193 = vdwg.mxu0
    %vm194 = vcmp.ge.f32.partialorder %v147, 0.0
    %vm195 = vcmp.ge.f32.partialorder %v149, 0.0
    %vm196 = vcmp.ge.f32.partialorder %v188, 0.0
    %vm197 = vcmp.ge.f32.partialorder %v190, 0.0
    %v198 = vmul.f32 %v147, 0.2
    %v199 = vmul.f32 %v149, 0.2
    %v200 = vmul.f32 %v188, 0.2
    %v201 = vmul.f32 %v190, 0.2
    %v202 = vsel %vm194, %v147, %v198
    %v203 = vsel %vm195, %v149, %v199
    %v204 = vsel %vm196, %v188, %v200
    %v205 = vsel %vm197, %v190, %v201
    %v206 = vpack.c.bf16 %v202, %v202
    %v207 = vpack.c.bf16 %v203, %v203
    %v208 = vpack.c.bf16 %v204, %v204
    %v209 = vpack.c.bf16 %v205, %v205
    %v210 = vld [vmem:[%s3] sm:$0xff]
    %v211 = vld [vmem:[%s3 + $0x8] sm:$0xff]
    %v212 = vld [vmem:[%s3 + $0x10] sm:$0xff]
    %v213 = vld [vmem:[%s3 + $0x18] sm:$0xff]
    %v214 = vld [vmem:[%s3 + $0x20] sm:$0xff]
    %v215 = vld [vmem:[%s3 + $0x28] sm:$0xff]
    %v216 = vld [vmem:[%s3 + $0x30] sm:$0xff]
    %v217 = vld [vmem:[%s3 + $0x38] sm:$0xff]
    %v218 = vld [vmem:[%s3 + $0x40] sm:$0xff]
    %v219 = vld [vmem:[%s3 + $0x48] sm:$0xff]
    %v220 = vld [vmem:[%s3 + $0x50] sm:$0xff]
    %v221 = vld [vmem:[%s3 + $0x58] sm:$0xff]
    %v222 = vld [vmem:[%s3 + $0x60] sm:$0xff]
    %v223 = vld [vmem:[%s3 + $0x68] sm:$0xff]
    %v224 = vld [vmem:[%s3 + $0x70] sm:$0xff]
    %v225 = vld [vmem:[%s3 + $0x78] sm:$0xff]
    %v226 = vld [vmem:[%s3 + $0x80] sm:$0xff]
    %v227 = vld [vmem:[%s3 + $0x88] sm:$0xff]
    %v228 = vld [vmem:[%s3 + $0x90] sm:$0xff]
    %v229 = vld [vmem:[%s3 + $0x98] sm:$0xff]
    %v230 = vld [vmem:[%s3 + $0xa0] sm:$0xff]
    %v231 = vld [vmem:[%s3 + $0xa8] sm:$0xff]
    %v232 = vld [vmem:[%s3 + $0xb0] sm:$0xff]
    %v233 = vld [vmem:[%s3 + $0xb8] sm:$0xff]
    %v234 = vld [vmem:[%s3 + $0xc0] sm:$0xff]
    %v235 = vld [vmem:[%s3 + $0xc8] sm:$0xff]
    %v236 = vld [vmem:[%s3 + $0xd0] sm:$0xff]
    %v237 = vld [vmem:[%s3 + $0xd8] sm:$0xff]
    %v238 = vld [vmem:[%s3 + $0xe0] sm:$0xff]
    %v239 = vld [vmem:[%s3 + $0xe8] sm:$0xff]
    %v240 = vld [vmem:[%s3 + $0xf0] sm:$0xff]
    %v241 = vld [vmem:[%s3 + $0xf8] sm:$0xff]
    %v242 = vld [vmem:[%s3 + $0x100] sm:$0xff]
    %v243 = vld [vmem:[%s3 + $0x108] sm:$0xff]
    %v244 = vld [vmem:[%s3 + $0x110] sm:$0xff]
    %v245 = vld [vmem:[%s3 + $0x118] sm:$0xff]
    %v246 = vld [vmem:[%s3 + $0x120] sm:$0xff]
    %v247 = vld [vmem:[%s3 + $0x128] sm:$0xff]
    %v248 = vld [vmem:[%s3 + $0x130] sm:$0xff]
    %v249 = vld [vmem:[%s3 + $0x138] sm:$0xff]
    %v250 = vld [vmem:[%s3 + $0x140] sm:$0xff]
    %v251 = vld [vmem:[%s3 + $0x148] sm:$0xff]
    %v252 = vld [vmem:[%s3 + $0x150] sm:$0xff]
    %v253 = vld [vmem:[%s3 + $0x158] sm:$0xff]
    %v254 = vld [vmem:[%s3 + $0x160] sm:$0xff]
    %v255 = vld [vmem:[%s3 + $0x168] sm:$0xff]
    %v256 = vld [vmem:[%s3 + $0x170] sm:$0xff]
    %v257 = vld [vmem:[%s3 + $0x178] sm:$0xff]
    %v258 = vld [vmem:[%s3 + $0x180] sm:$0xff]
    %v259 = vld [vmem:[%s3 + $0x188] sm:$0xff]
    %v260 = vld [vmem:[%s3 + $0x190] sm:$0xff]
    %v261 = vld [vmem:[%s3 + $0x198] sm:$0xff]
    %v262 = vld [vmem:[%s3 + $0x1a0] sm:$0xff]
    %v263 = vld [vmem:[%s3 + $0x1a8] sm:$0xff]
    %v264 = vld [vmem:[%s3 + $0x1b0] sm:$0xff]
    %v265 = vld [vmem:[%s3 + $0x1b8] sm:$0xff]
    %v266 = vld [vmem:[%s3 + $0x1c0] sm:$0xff]
    %v267 = vld [vmem:[%s3 + $0x1c8] sm:$0xff]
    %v268 = vld [vmem:[%s3 + $0x1d0] sm:$0xff]
    %v269 = vld [vmem:[%s3 + $0x1d8] sm:$0xff]
    %v270 = vld [vmem:[%s3 + $0x1e0] sm:$0xff]
    %v271 = vld [vmem:[%s3 + $0x1e8] sm:$0xff]
    %v272 = vld [vmem:[%s3 + $0x1f0] sm:$0xff]
    %v273 = vld [vmem:[%s3 + $0x1f8] sm:$0xff]
    %v274 = vld [vmem:[%s3 + $0x200] sm:$0xff]
    %v275 = vld [vmem:[%s3 + $0x208] sm:$0xff]
    %v276 = vld [vmem:[%s3 + $0x210] sm:$0xff]
    %v277 = vld [vmem:[%s3 + $0x218] sm:$0xff]
    %v278 = vld [vmem:[%s3 + $0x220] sm:$0xff]
    %v279 = vld [vmem:[%s3 + $0x228] sm:$0xff]
    %v280 = vld [vmem:[%s3 + $0x230] sm:$0xff]
    %v281 = vld [vmem:[%s3 + $0x238] sm:$0xff]
    %v282 = vld [vmem:[%s3 + $0x240] sm:$0xff]
    %v283 = vld [vmem:[%s3 + $0x248] sm:$0xff]
    %v284 = vld [vmem:[%s3 + $0x250] sm:$0xff]
    %v285 = vld [vmem:[%s3 + $0x258] sm:$0xff]
    %v286 = vld [vmem:[%s3 + $0x260] sm:$0xff]
    %v287 = vld [vmem:[%s3 + $0x268] sm:$0xff]
    %v288 = vld [vmem:[%s3 + $0x270] sm:$0xff]
    %v289 = vld [vmem:[%s3 + $0x278] sm:$0xff]
    %v290 = vld [vmem:[%s3 + $0x280] sm:$0xff]
    %v291 = vld [vmem:[%s3 + $0x288] sm:$0xff]
    %v292 = vld [vmem:[%s3 + $0x290] sm:$0xff]
    %v293 = vld [vmem:[%s3 + $0x298] sm:$0xff]
    %v294 = vld [vmem:[%s3 + $0x2a0] sm:$0xff]
    %v295 = vld [vmem:[%s3 + $0x2a8] sm:$0xff]
    %v296 = vld [vmem:[%s3 + $0x2b0] sm:$0xff]
    %v297 = vld [vmem:[%s3 + $0x2b8] sm:$0xff]
    %v298 = vld [vmem:[%s3 + $0x2c0] sm:$0xff]
    %v299 = vld [vmem:[%s3 + $0x2c8] sm:$0xff]
    %v300 = vld [vmem:[%s3 + $0x2d0] sm:$0xff]
    %v301 = vld [vmem:[%s3 + $0x2d8] sm:$0xff]
    %v302 = vld [vmem:[%s3 + $0x2e0] sm:$0xff]
    %v303 = vld [vmem:[%s3 + $0x2e8] sm:$0xff]
    %v304 = vld [vmem:[%s3 + $0x2f0] sm:$0xff]
    %v305 = vld [vmem:[%s3 + $0x2f8] sm:$0xff]
    %v306 = vld [vmem:[%s3 + $0x300] sm:$0xff]
    %v307 = vld [vmem:[%s3 + $0x308] sm:$0xff]
    %v308 = vld [vmem:[%s3 + $0x310] sm:$0xff]
    %v309 = vld [vmem:[%s3 + $0x318] sm:$0xff]
    %v310 = vld [vmem:[%s3 + $0x320] sm:$0xff]
    %v311 = vld [vmem:[%s3 + $0x328] sm:$0xff]
    %v312 = vld [vmem:[%s3 + $0x330] sm:$0xff]
    %v313 = vld [vmem:[%s3 + $0x338] sm:$0xff]
    %v314 = vld [vmem:[%s3 + $0x340] sm:$0xff]
    %v315 = vld [vmem:[%s3 + $0x348] sm:$0xff]
    %v316 = vld [vmem:[%s3 + $0x350] sm:$0xff]
    %v317 = vld [vmem:[%s3 + $0x358] sm:$0xff]
    %v318 = vld [vmem:[%s3 + $0x360] sm:$0xff]
    %v319 = vld [vmem:[%s3 + $0x368] sm:$0xff]
    %v320 = vld [vmem:[%s3 + $0x370] sm:$0xff]
    %v321 = vld [vmem:[%s3 + $0x378] sm:$0xff]
    %v322 = vld [vmem:[%s3 + $0x380] sm:$0xff]
    %v323 = vld [vmem:[%s3 + $0x388] sm:$0xff]
    %v324 = vld [vmem:[%s3 + $0x390] sm:$0xff]
    %v325 = vld [vmem:[%s3 + $0x398] sm:$0xff]
    %v326 = vld [vmem:[%s3 + $0x3a0] sm:$0xff]
    %v327 = vld [vmem:[%s3 + $0x3a8] sm:$0xff]
    %v328 = vld [vmem:[%s3 + $0x3b0] sm:$0xff]
    %v329 = vld [vmem:[%s3 + $0x3b8] sm:$0xff]
    %v330 = vld [vmem:[%s3 + $0x3c0] sm:$0xff]
    %v331 = vld [vmem:[%s3 + $0x3c8] sm:$0xff]
    %v332 = vld [vmem:[%s3 + $0x3d0] sm:$0xff]
    %v333 = vld [vmem:[%s3 + $0x3d8] sm:$0xff]
    %v334 = vld [vmem:[%s3 + $0x3e0] sm:$0xff]
    %v335 = vld [vmem:[%s3 + $0x3e8] sm:$0xff]
    %v336 = vld [vmem:[%s3 + $0x3f0] sm:$0xff]
    %v337 = vld [vmem:[%s3 + $0x3f8] sm:$0xff]
    %v338 = vld [vmem:[%s4] sm:$0xf]
    %v340 = vlaneseq
    %v341 = vshrl.u32 %v340, 7
    %v342 = vsub.s32 0, %v341
    %v343 = vrot.slane %v338, %v342
    %v344 = vlaneseq
    %v345 = vshrl.u32 %v344, 7
    %v346 = vsub.s32 1, %v345
    %v347 = vrot.slane %v338, %v346
    %v348 = vlaneseq
    %v349 = vshrl.u32 %v348, 7
    %v350 = vsub.s32 2, %v349
    %v351 = vrot.slane %v338, %v350
    %v352 = vlaneseq
    %v353 = vshrl.u32 %v352, 7
    %v354 = vsub.s32 3, %v353
    %v355 = vrot.slane %v338, %v354
    %v488 = vunpack.c.l.b16 %v210
    %v489 = vunpack.c.h.b16 %v210
    %v490 = vunpack.c.l.b16 %v211
    %v491 = vunpack.c.h.b16 %v211
    %v492 = vunpack.c.l.b16 %v212
    %v493 = vunpack.c.h.b16 %v212
    %v494 = vunpack.c.l.b16 %v213
    %v495 = vunpack.c.h.b16 %v213
    %v496 = vunpack.c.l.b16 %v214
    %v497 = vunpack.c.h.b16 %v214
    %v498 = vunpack.c.l.b16 %v215
    %v499 = vunpack.c.h.b16 %v215
    %v500 = vunpack.c.l.b16 %v216
    %v501 = vunpack.c.h.b16 %v216
    %v502 = vunpack.c.l.b16 %v217
    %v503 = vunpack.c.h.b16 %v217
    %v504 = vunpack.c.l.b16 %v218
    %v505 = vunpack.c.h.b16 %v218
    %v506 = vunpack.c.l.b16 %v219
    %v507 = vunpack.c.h.b16 %v219
    %v508 = vunpack.c.l.b16 %v220
    %v509 = vunpack.c.h.b16 %v220
    %v510 = vunpack.c.l.b16 %v221
    %v511 = vunpack.c.h.b16 %v221
    %v512 = vunpack.c.l.b16 %v222
    %v513 = vunpack.c.h.b16 %v222
    %v514 = vunpack.c.l.b16 %v223
    %v515 = vunpack.c.h.b16 %v223
    %v516 = vunpack.c.l.b16 %v224
    %v517 = vunpack.c.h.b16 %v224
    %v518 = vunpack.c.l.b16 %v225
    %v519 = vunpack.c.h.b16 %v225
    %v520 = vunpack.c.l.b16 %v226
    %v521 = vunpack.c.h.b16 %v226
    %v522 = vunpack.c.l.b16 %v227
    %v523 = vunpack.c.h.b16 %v227
    %v524 = vunpack.c.l.b16 %v228
    %v525 = vunpack.c.h.b16 %v228
    %v526 = vunpack.c.l.b16 %v229
    %v527 = vunpack.c.h.b16 %v229
    %v528 = vunpack.c.l.b16 %v230
    %v529 = vunpack.c.h.b16 %v230
    %v530 = vunpack.c.l.b16 %v231
    %v531 = vunpack.c.h.b16 %v231
    %v532 = vunpack.c.l.b16 %v232
    %v533 = vunpack.c.h.b16 %v232
    %v534 = vunpack.c.l.b16 %v233
    %v535 = vunpack.c.h.b16 %v233
    %v536 = vunpack.c.l.b16 %v234
    %v537 = vunpack.c.h.b16 %v234
    %v538 = vunpack.c.l.b16 %v235
    %v539 = vunpack.c.h.b16 %v235
    %v540 = vunpack.c.l.b16 %v236
    %v541 = vunpack.c.h.b16 %v236
    %v542 = vunpack.c.l.b16 %v237
    %v543 = vunpack.c.h.b16 %v237
    %v544 = vunpack.c.l.b16 %v238
    %v545 = vunpack.c.h.b16 %v238
    %v546 = vunpack.c.l.b16 %v239
    %v547 = vunpack.c.h.b16 %v239
    %v548 = vunpack.c.l.b16 %v240
    %v549 = vunpack.c.h.b16 %v240
    %v550 = vunpack.c.l.b16 %v241
    %v551 = vunpack.c.h.b16 %v241
    %v552 = vunpack.c.l.b16 %v242
    %v553 = vunpack.c.h.b16 %v242
    %v554 = vunpack.c.l.b16 %v243
    %v555 = vunpack.c.h.b16 %v243
    %v556 = vunpack.c.l.b16 %v244
    %v557 = vunpack.c.h.b16 %v244
    %v558 = vunpack.c.l.b16 %v245
    %v559 = vunpack.c.h.b16 %v245
    %v560 = vunpack.c.l.b16 %v246
    %v561 = vunpack.c.h.b16 %v246
    %v562 = vunpack.c.l.b16 %v247
    %v563 = vunpack.c.h.b16 %v247
    %v564 = vunpack.c.l.b16 %v248
    %v565 = vunpack.c.h.b16 %v248
    %v566 = vunpack.c.l.b16 %v249
    %v567 = vunpack.c.h.b16 %v249
    %v568 = vunpack.c.l.b16 %v250
    %v569 = vunpack.c.h.b16 %v250
    %v570 = vunpack.c.l.b16 %v251
    %v571 = vunpack.c.h.b16 %v251
    %v572 = vunpack.c.l.b16 %v252
    %v573 = vunpack.c.h.b16 %v252
    %v574 = vunpack.c.l.b16 %v253
    %v575 = vunpack.c.h.b16 %v253
    %v576 = vunpack.c.l.b16 %v254
    %v577 = vunpack.c.h.b16 %v254
    %v578 = vunpack.c.l.b16 %v255
    %v579 = vunpack.c.h.b16 %v255
    %v580 = vunpack.c.l.b16 %v256
    %v581 = vunpack.c.h.b16 %v256
    %v582 = vunpack.c.l.b16 %v257
    %v583 = vunpack.c.h.b16 %v257
    %v584 = vunpack.c.l.b16 %v258
    %v585 = vunpack.c.h.b16 %v258
    %v586 = vunpack.c.l.b16 %v259
    %v587 = vunpack.c.h.b16 %v259
    %v588 = vunpack.c.l.b16 %v260
    %v589 = vunpack.c.h.b16 %v260
    %v590 = vunpack.c.l.b16 %v261
    %v591 = vunpack.c.h.b16 %v261
    %v592 = vunpack.c.l.b16 %v262
    %v593 = vunpack.c.h.b16 %v262
    %v594 = vunpack.c.l.b16 %v263
    %v595 = vunpack.c.h.b16 %v263
    %v596 = vunpack.c.l.b16 %v264
    %v597 = vunpack.c.h.b16 %v264
    %v598 = vunpack.c.l.b16 %v265
    %v599 = vunpack.c.h.b16 %v265
    %v600 = vunpack.c.l.b16 %v266
    %v601 = vunpack.c.h.b16 %v266
    %v602 = vunpack.c.l.b16 %v267
    %v603 = vunpack.c.h.b16 %v267
    %v604 = vunpack.c.l.b16 %v268
    %v605 = vunpack.c.h.b16 %v268
    %v606 = vunpack.c.l.b16 %v269
    %v607 = vunpack.c.h.b16 %v269
    %v608 = vunpack.c.l.b16 %v270
    %v609 = vunpack.c.h.b16 %v270
    %v610 = vunpack.c.l.b16 %v271
    %v611 = vunpack.c.h.b16 %v271
    %v612 = vunpack.c.l.b16 %v272
    %v613 = vunpack.c.h.b16 %v272
    %v614 = vunpack.c.l.b16 %v273
    %v615 = vunpack.c.h.b16 %v273
    %v616 = vunpack.c.l.b16 %v274
    %v617 = vunpack.c.h.b16 %v274
    %v618 = vunpack.c.l.b16 %v275
    %v619 = vunpack.c.h.b16 %v275
    %v620 = vunpack.c.l.b16 %v276
    %v621 = vunpack.c.h.b16 %v276
    %v622 = vunpack.c.l.b16 %v277
    %v623 = vunpack.c.h.b16 %v277
    %v624 = vunpack.c.l.b16 %v278
    %v625 = vunpack.c.h.b16 %v278
    %v626 = vunpack.c.l.b16 %v279
    %v627 = vunpack.c.h.b16 %v279
    %v628 = vunpack.c.l.b16 %v280
    %v629 = vunpack.c.h.b16 %v280
    %v630 = vunpack.c.l.b16 %v281
    %v631 = vunpack.c.h.b16 %v281
    %v632 = vunpack.c.l.b16 %v282
    %v633 = vunpack.c.h.b16 %v282
    %v634 = vunpack.c.l.b16 %v283
    %v635 = vunpack.c.h.b16 %v283
    %v636 = vunpack.c.l.b16 %v284
    %v637 = vunpack.c.h.b16 %v284
    %v638 = vunpack.c.l.b16 %v285
    %v639 = vunpack.c.h.b16 %v285
    %v640 = vunpack.c.l.b16 %v286
    %v641 = vunpack.c.h.b16 %v286
    %v642 = vunpack.c.l.b16 %v287
    %v643 = vunpack.c.h.b16 %v287
    %v644 = vunpack.c.l.b16 %v288
    %v645 = vunpack.c.h.b16 %v288
    %v646 = vunpack.c.l.b16 %v289
    %v647 = vunpack.c.h.b16 %v289
    %v648 = vunpack.c.l.b16 %v290
    %v649 = vunpack.c.h.b16 %v290
    %v650 = vunpack.c.l.b16 %v291
    %v651 = vunpack.c.h.b16 %v291
    %v652 = vunpack.c.l.b16 %v292
    %v653 = vunpack.c.h.b16 %v292
    %v654 = vunpack.c.l.b16 %v293
    %v655 = vunpack.c.h.b16 %v293
    %v656 = vunpack.c.l.b16 %v294
    %v657 = vunpack.c.h.b16 %v294
    %v658 = vunpack.c.l.b16 %v295
    %v659 = vunpack.c.h.b16 %v295
    %v660 = vunpack.c.l.b16 %v296
    %v661 = vunpack.c.h.b16 %v296
    %v662 = vunpack.c.l.b16 %v297
    %v663 = vunpack.c.h.b16 %v297
    %v664 = vunpack.c.l.b16 %v298
    %v665 = vunpack.c.h.b16 %v298
    %v666 = vunpack.c.l.b16 %v299
    %v667 = vunpack.c.h.b16 %v299
    %v668 = vunpack.c.l.b16 %v300
    %v669 = vunpack.c.h.b16 %v300
    %v670 = vunpack.c.l.b16 %v301
    %v671 = vunpack.c.h.b16 %v301
    %v672 = vunpack.c.l.b16 %v302
    %v673 = vunpack.c.h.b16 %v302
    %v674 = vunpack.c.l.b16 %v303
    %v675 = vunpack.c.h.b16 %v303
    %v676 = vunpack.c.l.b16 %v304
    %v677 = vunpack.c.h.b16 %v304
    %v678 = vunpack.c.l.b16 %v305
    %v679 = vunpack.c.h.b16 %v305
    %v680 = vunpack.c.l.b16 %v306
    %v681 = vunpack.c.h.b16 %v306
    %v682 = vunpack.c.l.b16 %v307
    %v683 = vunpack.c.h.b16 %v307
    %v684 = vunpack.c.l.b16 %v308
    %v685 = vunpack.c.h.b16 %v308
    %v686 = vunpack.c.l.b16 %v309
    %v687 = vunpack.c.h.b16 %v309
    %v688 = vunpack.c.l.b16 %v310
    %v689 = vunpack.c.h.b16 %v310
    %v690 = vunpack.c.l.b16 %v311
    %v691 = vunpack.c.h.b16 %v311
    %v692 = vunpack.c.l.b16 %v312
    %v693 = vunpack.c.h.b16 %v312
    %v694 = vunpack.c.l.b16 %v313
    %v695 = vunpack.c.h.b16 %v313
    %v696 = vunpack.c.l.b16 %v314
    %v697 = vunpack.c.h.b16 %v314
    %v698 = vunpack.c.l.b16 %v315
    %v699 = vunpack.c.h.b16 %v315
    %v700 = vunpack.c.l.b16 %v316
    %v701 = vunpack.c.h.b16 %v316
    %v702 = vunpack.c.l.b16 %v317
    %v703 = vunpack.c.h.b16 %v317
    %v704 = vunpack.c.l.b16 %v318
    %v705 = vunpack.c.h.b16 %v318
    %v706 = vunpack.c.l.b16 %v319
    %v707 = vunpack.c.h.b16 %v319
    %v708 = vunpack.c.l.b16 %v320
    %v709 = vunpack.c.h.b16 %v320
    %v710 = vunpack.c.l.b16 %v321
    %v711 = vunpack.c.h.b16 %v321
    %v712 = vunpack.c.l.b16 %v322
    %v713 = vunpack.c.h.b16 %v322
    %v714 = vunpack.c.l.b16 %v323
    %v715 = vunpack.c.h.b16 %v323
    %v716 = vunpack.c.l.b16 %v324
    %v717 = vunpack.c.h.b16 %v324
    %v718 = vunpack.c.l.b16 %v325
    %v719 = vunpack.c.h.b16 %v325
    %v720 = vunpack.c.l.b16 %v326
    %v721 = vunpack.c.h.b16 %v326
    %v722 = vunpack.c.l.b16 %v327
    %v723 = vunpack.c.h.b16 %v327
    %v724 = vunpack.c.l.b16 %v328
    %v725 = vunpack.c.h.b16 %v328
    %v726 = vunpack.c.l.b16 %v329
    %v727 = vunpack.c.h.b16 %v329
    %v728 = vunpack.c.l.b16 %v330
    %v729 = vunpack.c.h.b16 %v330
    %v730 = vunpack.c.l.b16 %v331
    %v731 = vunpack.c.h.b16 %v331
    %v732 = vunpack.c.l.b16 %v332
    %v733 = vunpack.c.h.b16 %v332
    %v734 = vunpack.c.l.b16 %v333
    %v735 = vunpack.c.h.b16 %v333
    %v736 = vunpack.c.l.b16 %v334
    %v737 = vunpack.c.h.b16 %v334
    %v738 = vunpack.c.l.b16 %v335
    %v739 = vunpack.c.h.b16 %v335
    %v740 = vunpack.c.l.b16 %v336
    %v741 = vunpack.c.h.b16 %v336
    %v742 = vunpack.c.l.b16 %v337
    %v743 = vunpack.c.h.b16 %v337
    %v744 = vpack.c.b16 %v492, %v488
    %v745 = vpack.c.b16 %v493, %v489
    %v746 = vpack.c.b16 %v494, %v490
    %v747 = vpack.c.b16 %v495, %v491
    %v748 = vpack.c.b16 %v500, %v496
    %v749 = vpack.c.b16 %v501, %v497
    %v750 = vpack.c.b16 %v502, %v498
    %v751 = vpack.c.b16 %v503, %v499
    %v752 = vpack.c.b16 %v508, %v504
    %v753 = vpack.c.b16 %v509, %v505
    %v754 = vpack.c.b16 %v510, %v506
    %v755 = vpack.c.b16 %v511, %v507
    %v756 = vpack.c.b16 %v516, %v512
    %v757 = vpack.c.b16 %v517, %v513
    %v758 = vpack.c.b16 %v518, %v514
    %v759 = vpack.c.b16 %v519, %v515
    %v760 = vpack.c.b16 %v524, %v520
    %v761 = vpack.c.b16 %v525, %v521
    %v762 = vpack.c.b16 %v526, %v522
    %v763 = vpack.c.b16 %v527, %v523
    %v764 = vpack.c.b16 %v532, %v528
    %v765 = vpack.c.b16 %v533, %v529
    %v766 = vpack.c.b16 %v534, %v530
    %v767 = vpack.c.b16 %v535, %v531
    %v768 = vpack.c.b16 %v540, %v536
    %v769 = vpack.c.b16 %v541, %v537
    %v770 = vpack.c.b16 %v542, %v538
    %v771 = vpack.c.b16 %v543, %v539
    %v772 = vpack.c.b16 %v548, %v544
    %v773 = vpack.c.b16 %v549, %v545
    %v774 = vpack.c.b16 %v550, %v546
    %v775 = vpack.c.b16 %v551, %v547
    %v776 = vpack.c.b16 %v556, %v552
    %v777 = vpack.c.b16 %v557, %v553
    %v778 = vpack.c.b16 %v558, %v554
    %v779 = vpack.c.b16 %v559, %v555
    %v780 = vpack.c.b16 %v564, %v560
    %v781 = vpack.c.b16 %v565, %v561
    %v782 = vpack.c.b16 %v566, %v562
    %v783 = vpack.c.b16 %v567, %v563
    %v784 = vpack.c.b16 %v572, %v568
    %v785 = vpack.c.b16 %v573, %v569
    %v786 = vpack.c.b16 %v574, %v570
    %v787 = vpack.c.b16 %v575, %v571
    %v788 = vpack.c.b16 %v580, %v576
    %v789 = vpack.c.b16 %v581, %v577
    %v790 = vpack.c.b16 %v582, %v578
    %v791 = vpack.c.b16 %v583, %v579
    %v792 = vpack.c.b16 %v588, %v584
    %v793 = vpack.c.b16 %v589, %v585
    %v794 = vpack.c.b16 %v590, %v586
    %v795 = vpack.c.b16 %v591, %v587
    %v796 = vpack.c.b16 %v596, %v592
    %v797 = vpack.c.b16 %v597, %v593
    %v798 = vpack.c.b16 %v598, %v594
    %v799 = vpack.c.b16 %v599, %v595
    %v800 = vpack.c.b16 %v604, %v600
    %v801 = vpack.c.b16 %v605, %v601
    %v802 = vpack.c.b16 %v606, %v602
    %v803 = vpack.c.b16 %v607, %v603
    %v804 = vpack.c.b16 %v612, %v608
    %v805 = vpack.c.b16 %v613, %v609
    %v806 = vpack.c.b16 %v614, %v610
    %v807 = vpack.c.b16 %v615, %v611
    %v808 = vpack.c.b16 %v620, %v616
    %v809 = vpack.c.b16 %v621, %v617
    %v810 = vpack.c.b16 %v622, %v618
    %v811 = vpack.c.b16 %v623, %v619
    %v812 = vpack.c.b16 %v628, %v624
    %v813 = vpack.c.b16 %v629, %v625
    %v814 = vpack.c.b16 %v630, %v626
    %v815 = vpack.c.b16 %v631, %v627
    %v816 = vpack.c.b16 %v636, %v632
    %v817 = vpack.c.b16 %v637, %v633
    %v818 = vpack.c.b16 %v638, %v634
    %v819 = vpack.c.b16 %v639, %v635
    %v820 = vpack.c.b16 %v644, %v640
    %v821 = vpack.c.b16 %v645, %v641
    %v822 = vpack.c.b16 %v646, %v642
    %v823 = vpack.c.b16 %v647, %v643
    %v824 = vpack.c.b16 %v652, %v648
    %v825 = vpack.c.b16 %v653, %v649
    %v826 = vpack.c.b16 %v654, %v650
    %v827 = vpack.c.b16 %v655, %v651
    %v828 = vpack.c.b16 %v660, %v656
    %v829 = vpack.c.b16 %v661, %v657
    %v830 = vpack.c.b16 %v662, %v658
    %v831 = vpack.c.b16 %v663, %v659
    %v832 = vpack.c.b16 %v668, %v664
    %v833 = vpack.c.b16 %v669, %v665
    %v834 = vpack.c.b16 %v670, %v666
    %v835 = vpack.c.b16 %v671, %v667
    %v836 = vpack.c.b16 %v676, %v672
    %v837 = vpack.c.b16 %v677, %v673
    %v838 = vpack.c.b16 %v678, %v674
    %v839 = vpack.c.b16 %v679, %v675
    %v840 = vpack.c.b16 %v684, %v680
    %v841 = vpack.c.b16 %v685, %v681
    %v842 = vpack.c.b16 %v686, %v682
    %v843 = vpack.c.b16 %v687, %v683
    %v844 = vpack.c.b16 %v692, %v688
    %v845 = vpack.c.b16 %v693, %v689
    %v846 = vpack.c.b16 %v694, %v690
    %v847 = vpack.c.b16 %v695, %v691
    %v848 = vpack.c.b16 %v700, %v696
    %v849 = vpack.c.b16 %v701, %v697
    %v850 = vpack.c.b16 %v702, %v698
    %v851 = vpack.c.b16 %v703, %v699
    %v852 = vpack.c.b16 %v708, %v704
    %v853 = vpack.c.b16 %v709, %v705
    %v854 = vpack.c.b16 %v710, %v706
    %v855 = vpack.c.b16 %v711, %v707
    %v856 = vpack.c.b16 %v716, %v712
    %v857 = vpack.c.b16 %v717, %v713
    %v858 = vpack.c.b16 %v718, %v714
    %v859 = vpack.c.b16 %v719, %v715
    %v860 = vpack.c.b16 %v724, %v720
    %v861 = vpack.c.b16 %v725, %v721
    %v862 = vpack.c.b16 %v726, %v722
    %v863 = vpack.c.b16 %v727, %v723
    %v864 = vpack.c.b16 %v732, %v728
    %v865 = vpack.c.b16 %v733, %v729
    %v866 = vpack.c.b16 %v734, %v730
    %v867 = vpack.c.b16 %v735, %v731
    %v868 = vpack.c.b16 %v740, %v736
    %v869 = vpack.c.b16 %v741, %v737
    %v870 = vpack.c.b16 %v742, %v738
    %v871 = vpack.c.b16 %v743, %v739
    %1000 = vmatprep.subr.bf16.mxu0 %v745
    %1001 = vmatpush1.bf16.msra.mxu0 %v744
    %1002 = vmatprep.subr.bf16.mxu0 %v749
    %1003 = vmatpush1.bf16.msra.mxu0 %v748
    %1004 = vmatprep.subr.bf16.mxu0 %v753
    %1005 = vmatpush1.bf16.msra.mxu0 %v752
    %1006 = vmatprep.subr.bf16.mxu0 %v757
    %1007 = vmatpush1.bf16.msra.mxu0 %v756
    %1008 = vmatprep.subr.bf16.mxu0 %v761
    %1009 = vmatpush1.bf16.msra.mxu0 %v760
    %1010 = vmatprep.subr.bf16.mxu0 %v765
    %1011 = vmatpush1.bf16.msra.mxu0 %v764
    %1012 = vmatprep.subr.bf16.mxu0 %v769
    %1013 = vmatpush1.bf16.msra.mxu0 %v768
    %1014 = vmatprep.subr.bf16.mxu0 %v773
    %1015 = vmatpush1.bf16.msra.mxu0 %v772
    %1016 = vmatprep.subr.bf16.mxu0 %v777
    %1017 = vmatpush1.bf16.msra.mxu0 %v776
    %1018 = vmatprep.subr.bf16.mxu0 %v781
    %1019 = vmatpush1.bf16.msra.mxu0 %v780
    %1020 = vmatprep.subr.bf16.mxu0 %v785
    %1021 = vmatpush1.bf16.msra.mxu0 %v784
    %1022 = vmatprep.subr.bf16.mxu0 %v789
    %1023 = vmatpush1.bf16.msra.mxu0 %v788
    %1024 = vmatprep.subr.bf16.mxu0 %v793
    %1025 = vmatpush1.bf16.msra.mxu0 %v792
    %1026 = vmatprep.subr.bf16.mxu0 %v797
    %1027 = vmatpush1.bf16.msra.mxu0 %v796
    %1028 = vmatprep.subr.bf16.mxu0 %v801
    %1029 = vmatpush1.bf16.msra.mxu0 %v800
    %1030 = vmatprep.subr.bf16.mxu0 %v805
    %1031 = vmatpush1.bf16.msra.mxu0 %v804
    %1032 = vmatprep.mubr.bf16.mxu0 %v207
    %1033 = vmatmul.mubr.bf16.gmra.mrb[0].mxu0 %v206
    %v1034 = vpop.f32.mrb[0].mxu0
    %v1035 = vadd.f32 %v343, %v1034
    %v1036 = vpop.f32.mrb[0].mxu0
    %v1037 = vadd.f32 %v347, %v1036
    %v1038 = vpop.f32.mrb[0].mxu0
    %v1039 = vpop.f32.mrb[0].mxu0
    %1040 = vdwg.mxu0
    %1041 = vmatprep.subr.bf16.mxu0 %v809
    %1042 = vmatpush1.bf16.msra.mxu0 %v808
    %1043 = vmatprep.subr.bf16.mxu0 %v813
    %1044 = vmatpush1.bf16.msra.mxu0 %v812
    %1045 = vmatprep.subr.bf16.mxu0 %v817
    %1046 = vmatpush1.bf16.msra.mxu0 %v816
    %1047 = vmatprep.subr.bf16.mxu0 %v821
    %1048 = vmatpush1.bf16.msra.mxu0 %v820
    %1049 = vmatprep.subr.bf16.mxu0 %v825
    %1050 = vmatpush1.bf16.msra.mxu0 %v824
    %1051 = vmatprep.subr.bf16.mxu0 %v829
    %1052 = vmatpush1.bf16.msra.mxu0 %v828
    %1053 = vmatprep.subr.bf16.mxu0 %v833
    %1054 = vmatpush1.bf16.msra.mxu0 %v832
    %1055 = vmatprep.subr.bf16.mxu0 %v837
    %1056 = vmatpush1.bf16.msra.mxu0 %v836
    %1057 = vmatprep.subr.bf16.mxu0 %v841
    %1058 = vmatpush1.bf16.msra.mxu0 %v840
    %1059 = vmatprep.subr.bf16.mxu0 %v845
    %1060 = vmatpush1.bf16.msra.mxu0 %v844
    %1061 = vmatprep.subr.bf16.mxu0 %v849
    %1062 = vmatpush1.bf16.msra.mxu0 %v848
    %1063 = vmatprep.subr.bf16.mxu0 %v853
    %1064 = vmatpush1.bf16.msra.mxu0 %v852
    %1065 = vmatprep.subr.bf16.mxu0 %v857
    %1066 = vmatpush1.bf16.msra.mxu0 %v856
    %1067 = vmatprep.subr.bf16.mxu0 %v861
    %1068 = vmatpush1.bf16.msra.mxu0 %v860
    %1069 = vmatprep.subr.bf16.mxu0 %v865
    %1070 = vmatpush1.bf16.msra.mxu0 %v864
    %1071 = vmatprep.subr.bf16.mxu0 %v869
    %1072 = vmatpush1.bf16.msra.mxu0 %v868
    %1073 = vmatprep.mubr.bf16.mxu0 %v209
    %1074 = vmatmul.mubr.bf16.gmra.mrb[0].mxu0 %v208
    %v1075 = vpop.f32.mrb[0].mxu0
    %v1076 = vadd.f32 %v1035, %v1075
    %v1077 = vpop.f32.mrb[0].mxu0
    %v1078 = vadd.f32 %v1037, %v1077
    %v1079 = vpop.f32.mrb[0].mxu0
    %v1080 = vpop.f32.mrb[0].mxu0
    %1081 = vdwg.mxu0
    %1082 = vmatprep.subr.bf16.mxu0 %v747
    %1083 = vmatpush1.bf16.msra.mxu0 %v746
    %1084 = vmatprep.subr.bf16.mxu0 %v751
    %1085 = vmatpush1.bf16.msra.mxu0 %v750
    %1086 = vmatprep.subr.bf16.mxu0 %v755
    %1087 = vmatpush1.bf16.msra.mxu0 %v754
    %1088 = vmatprep.subr.bf16.mxu0 %v759
    %1089 = vmatpush1.bf16.msra.mxu0 %v758
    %1090 = vmatprep.subr.bf16.mxu0 %v763
    %1091 = vmatpush1.bf16.msra.mxu0 %v762
    %1092 = vmatprep.subr.bf16.mxu0 %v767
    %1093 = vmatpush1.bf16.msra.mxu0 %v766
    %1094 = vmatprep.subr.bf16.mxu0 %v771
    %1095 = vmatpush1.bf16.msra.mxu0 %v770
    %1096 = vmatprep.subr.bf16.mxu0 %v775
    %1097 = vmatpush1.bf16.msra.mxu0 %v774
    %1098 = vmatprep.subr.bf16.mxu0 %v779
    %1099 = vmatpush1.bf16.msra.mxu0 %v778
    %1100 = vmatprep.subr.bf16.mxu0 %v783
    %1101 = vmatpush1.bf16.msra.mxu0 %v782
    %1102 = vmatprep.subr.bf16.mxu0 %v787
    %1103 = vmatpush1.bf16.msra.mxu0 %v786
    %1104 = vmatprep.subr.bf16.mxu0 %v791
    %1105 = vmatpush1.bf16.msra.mxu0 %v790
    %1106 = vmatprep.subr.bf16.mxu0 %v795
    %1107 = vmatpush1.bf16.msra.mxu0 %v794
    %1108 = vmatprep.subr.bf16.mxu0 %v799
    %1109 = vmatpush1.bf16.msra.mxu0 %v798
    %1110 = vmatprep.subr.bf16.mxu0 %v803
    %1111 = vmatpush1.bf16.msra.mxu0 %v802
    %1112 = vmatprep.subr.bf16.mxu0 %v807
    %1113 = vmatpush1.bf16.msra.mxu0 %v806
    %1114 = vmatprep.mubr.bf16.mxu0 %v207
    %1115 = vmatmul.mubr.bf16.gmra.mrb[0].mxu0 %v206
    %v1116 = vpop.f32.mrb[0].mxu0
    %v1117 = vadd.f32 %v351, %v1116
    %v1118 = vpop.f32.mrb[0].mxu0
    %v1119 = vadd.f32 %v355, %v1118
    %v1120 = vpop.f32.mrb[0].mxu0
    %v1121 = vpop.f32.mrb[0].mxu0
    %1122 = vdwg.mxu0
    %1123 = vmatprep.subr.bf16.mxu0 %v811
    %1124 = vmatpush1.bf16.msra.mxu0 %v810
    %1125 = vmatprep.subr.bf16.mxu0 %v815
    %1126 = vmatpush1.bf16.msra.mxu0 %v814
    %1127 = vmatprep.subr.bf16.mxu0 %v819
    %1128 = vmatpush1.bf16.msra.mxu0 %v818
    %1129 = vmatprep.subr.bf16.mxu0 %v823
    %1130 = vmatpush1.bf16.msra.mxu0 %v822
    %1131 = vmatprep.subr.bf16.mxu0 %v827
    %1132 = vmatpush1.bf16.msra.mxu0 %v826
    %1133 = vmatprep.subr.bf16.mxu0 %v831
    %1134 = vmatpush1.bf16.msra.mxu0 %v830
    %1135 = vmatprep.subr.bf16.mxu0 %v835
    %1136 = vmatpush1.bf16.msra.mxu0 %v834
    %1137 = vmatprep.subr.bf16.mxu0 %v839
    %1138 = vmatpush1.bf16.msra.mxu0 %v838
    %1139 = vmatprep.subr.bf16.mxu0 %v843
    %1140 = vmatpush1.bf16.msra.mxu0 %v842
    %1141 = vmatprep.subr.bf16.mxu0 %v847
    %1142 = vmatpush1.bf16.msra.mxu0 %v846
    %1143 = vmatprep.subr.bf16.mxu0 %v851
    %1144 = vmatpush1.bf16.msra.mxu0 %v850
    %1145 = vmatprep.subr.bf16.mxu0 %v855
    %1146 = vmatpush1.bf16.msra.mxu0 %v854
    %1147 = vmatprep.subr.bf16.mxu0 %v859
    %1148 = vmatpush1.bf16.msra.mxu0 %v858
    %1149 = vmatprep.subr.bf16.mxu0 %v863
    %1150 = vmatpush1.bf16.msra.mxu0 %v862
    %1151 = vmatprep.subr.bf16.mxu0 %v867
    %1152 = vmatpush1.bf16.msra.mxu0 %v866
    %1153 = vmatprep.subr.bf16.mxu0 %v871
    %1154 = vmatpush1.bf16.msra.mxu0 %v870
    %1155 = vmatprep.mubr.bf16.mxu0 %v209
    %1156 = vmatmul.mubr.bf16.gmra.mrb[0].mxu0 %v208
    %v1157 = vpop.f32.mrb[0].mxu0
    %v1158 = vadd.f32 %v1117, %v1157
    %v1159 = vpop.f32.mrb[0].mxu0
    %v1160 = vadd.f32 %v1119, %v1159
    %v1161 = vpop.f32.mrb[0].mxu0
    %v1162 = vpop.f32.mrb[0].mxu0
    %1163 = vdwg.mxu0
    %v1164 = vlaneseq
    %v1165 = vshrl.u32 %v1164, 7
    %vm1166 = vcmp.lt.s32.totalorder %v1165, 8
    %v1167 = vsel %vm1166, 1, 0
    %vm1168 = vcmp.eq.s32.totalorder %v1167, 1
    %v1169 = vsel %vm1168, %v1076, 0.0
    %v1170 = vsel %vm1168, %v1078, 0.0
    %v1171 = vsel %vm1168, %v1158, 0.0
    %v1172 = vsel %vm1168, %v1160, 0.0
    %v1173 = vrot.slane %v1169, 4
    %v1174 = vadd.f32 %v1169, %v1173
    %v1175 = vrot.slane %v1174, 2
    %v1176 = vadd.f32 %v1174, %v1175
    %v1177 = vrot.slane %v1176, 1
    %v1178 = vadd.f32 %v1176, %v1177
    %v1179 = vrot.slane %v1170, 4
    %v1180 = vadd.f32 %v1170, %v1179
    %v1181 = vrot.slane %v1180, 2
    %v1182 = vadd.f32 %v1180, %v1181
    %v1183 = vrot.slane %v1182, 1
    %v1184 = vadd.f32 %v1182, %v1183
    %v1185 = vrot.slane %v1171, 4
    %v1186 = vadd.f32 %v1171, %v1185
    %v1187 = vrot.slane %v1186, 2
    %v1188 = vadd.f32 %v1186, %v1187
    %v1189 = vrot.slane %v1188, 1
    %v1190 = vadd.f32 %v1188, %v1189
    %v1191 = vrot.slane %v1172, 4
    %v1192 = vadd.f32 %v1172, %v1191
    %v1193 = vrot.slane %v1192, 2
    %v1194 = vadd.f32 %v1192, %v1193
    %v1195 = vrot.slane %v1194, 1
    %v1196 = vadd.f32 %v1194, %v1195
    %v1197 = vmul.f32 %v1178, 0.125
    %v1198 = vmul.f32 %v1184, 0.125
    %v1199 = vmul.f32 %v1190, 0.125
    %v1200 = vmul.f32 %v1196, 0.125
    %v1201 = vmul.f32 %v1169, %v1169
    %v1202 = vmul.f32 %v1170, %v1170
    %v1203 = vmul.f32 %v1171, %v1171
    %v1204 = vmul.f32 %v1172, %v1172
    %v1205 = vrot.slane %v1201, 4
    %v1206 = vadd.f32 %v1201, %v1205
    %v1207 = vrot.slane %v1206, 2
    %v1208 = vadd.f32 %v1206, %v1207
    %v1209 = vrot.slane %v1208, 1
    %v1210 = vadd.f32 %v1208, %v1209
    %v1211 = vrot.slane %v1202, 4
    %v1212 = vadd.f32 %v1202, %v1211
    %v1213 = vrot.slane %v1212, 2
    %v1214 = vadd.f32 %v1212, %v1213
    %v1215 = vrot.slane %v1214, 1
    %v1216 = vadd.f32 %v1214, %v1215
    %v1217 = vrot.slane %v1203, 4
    %v1218 = vadd.f32 %v1203, %v1217
    %v1219 = vrot.slane %v1218, 2
    %v1220 = vadd.f32 %v1218, %v1219
    %v1221 = vrot.slane %v1220, 1
    %v1222 = vadd.f32 %v1220, %v1221
    %v1223 = vrot.slane %v1204, 4
    %v1224 = vadd.f32 %v1204, %v1223
    %v1225 = vrot.slane %v1224, 2
    %v1226 = vadd.f32 %v1224, %v1225
    %v1227 = vrot.slane %v1226, 1
    %v1228 = vadd.f32 %v1226, %v1227
    %v1229 = vmul.f32 %v1210, 0.125
    %v1230 = vmul.f32 %v1216, 0.125
    %v1231 = vmul.f32 %v1222, 0.125
    %v1232 = vmul.f32 %v1228, 0.125
    %v1233 = vmul.f32 %v1197, %v1197
    %v1234 = vmul.f32 %v1198, %v1198
    %v1235 = vmul.f32 %v1199, %v1199
    %v1236 = vmul.f32 %v1200, %v1200
    %v1237 = vsub.f32 %v1229, %v1233
    %v1238 = vsub.f32 %v1230, %v1234
    %v1239 = vsub.f32 %v1231, %v1235
    %v1240 = vsub.f32 %v1232, %v1236
    %v1241 = vmax.f32 %v1237, 0.0
    %v1242 = vmax.f32 %v1238, 0.0
    %v1243 = vmax.f32 %v1239, 0.0
    %v1244 = vmax.f32 %v1240, 0.0
    %v1245 = vadd.f32 %v1241, 1e-05
    %v1246 = vadd.f32 %v1242, 1e-05
    %v1247 = vadd.f32 %v1243, 1e-05
    %v1248 = vadd.f32 %v1244, 1e-05
    %v1249 = vrsqrt.pop %v1245
    %v1250 = vrsqrt.pop %v1246
    %v1251 = vrsqrt.pop %v1247
    %v1252 = vrsqrt.pop %v1248
    %v1253 = vsub.f32 %v1076, %v1197
    %v1254 = vsub.f32 %v1078, %v1198
    %v1255 = vsub.f32 %v1158, %v1199
    %v1256 = vsub.f32 %v1160, %v1200
    %v1257 = vmul.f32 %v1253, %v1249
    %v1258 = vmul.f32 %v1254, %v1250
    %v1259 = vmul.f32 %v1255, %v1251
    %v1260 = vmul.f32 %v1256, %v1252
    %v1261 = vld [vmem:[%s5] sm:$0xf]
    %v1263 = vlaneseq
    %v1264 = vshrl.u32 %v1263, 7
    %v1265 = vsub.s32 0, %v1264
    %v1266 = vrot.slane %v1261, %v1265
    %v1267 = vlaneseq
    %v1268 = vshrl.u32 %v1267, 7
    %v1269 = vsub.s32 1, %v1268
    %v1270 = vrot.slane %v1261, %v1269
    %v1271 = vlaneseq
    %v1272 = vshrl.u32 %v1271, 7
    %v1273 = vsub.s32 2, %v1272
    %v1274 = vrot.slane %v1261, %v1273
    %v1275 = vlaneseq
    %v1276 = vshrl.u32 %v1275, 7
    %v1277 = vsub.s32 3, %v1276
    %v1278 = vrot.slane %v1261, %v1277
    %v1283 = vmul.f32 %v1257, %v1266
    %v1284 = vmul.f32 %v1258, %v1270
    %v1285 = vmul.f32 %v1259, %v1274
    %v1286 = vmul.f32 %v1260, %v1278
    %v1287 = vld [vmem:[%s6] sm:$0xf]
    %v1289 = vlaneseq
    %v1290 = vshrl.u32 %v1289, 7
    %v1291 = vsub.s32 0, %v1290
    %v1292 = vrot.slane %v1287, %v1291
    %v1293 = vlaneseq
    %v1294 = vshrl.u32 %v1293, 7
    %v1295 = vsub.s32 1, %v1294
    %v1296 = vrot.slane %v1287, %v1295
    %v1297 = vlaneseq
    %v1298 = vshrl.u32 %v1297, 7
    %v1299 = vsub.s32 2, %v1298
    %v1300 = vrot.slane %v1287, %v1299
    %v1301 = vlaneseq
    %v1302 = vshrl.u32 %v1301, 7
    %v1303 = vsub.s32 3, %v1302
    %v1304 = vrot.slane %v1287, %v1303
    %v1309 = vadd.f32 %v1283, %v1292
    %v1310 = vadd.f32 %v1284, %v1296
    %v1311 = vadd.f32 %v1285, %v1300
    %v1312 = vadd.f32 %v1286, %v1304
    %vm1313 = vcmp.ge.f32.partialorder %v1309, 0.0
    %vm1314 = vcmp.ge.f32.partialorder %v1310, 0.0
    %vm1315 = vcmp.ge.f32.partialorder %v1311, 0.0
    %vm1316 = vcmp.ge.f32.partialorder %v1312, 0.0
    %v1317 = vmul.f32 %v1309, 0.2
    %v1318 = vmul.f32 %v1310, 0.2
    %v1319 = vmul.f32 %v1311, 0.2
    %v1320 = vmul.f32 %v1312, 0.2
    %v1321 = vsel %vm1313, %v1309, %v1317
    %v1322 = vsel %vm1314, %v1310, %v1318
    %v1323 = vsel %vm1315, %v1311, %v1319
    %v1324 = vsel %vm1316, %v1312, %v1320
    %v1325 = vld [vmem:[%s7] sm:$0xf]
    %v1326 = vpack.c.bf16 %v1321, %v1321
    %v1327 = vpack.c.bf16 %v1322, %v1322
    %v1328 = vpack.c.bf16 %v1323, %v1323
    %v1329 = vpack.c.bf16 %v1324, %v1324
    %v1330 = vld [vmem:[#allocation2] sm:$0x1]
    %1332 = vset.pattern.permute.xlu0 0
    %1333 = vperm.xlu0 %1332, %v1330
    %v1334 = vpop.permute.xlu0 %1333
    %v1336 = vlaneseq
    %v1337 = vshrl.u32 %v1336, 7
    %v1338 = vsub.s32 0, %v1337
    %v1339 = vrot.slane %v1334, %v1338
    %v1342 = vunpack.c.l.s4 1966171168
    %v1343 = vunpack.c.0.s8 %v1342
    %v1344 = vlaneseq
    %v1345 = vshrl.u32 %v1344, 7
    %v1346 = vsub.s32 %v1343, %v1345
    %v1347 = vrot.slane %v1325, %v1346
    %v1348 = vcombine.high %v1347, %v1347
    %v1350 = vunpack.c.l.s4 1966171168
    %v1351 = vunpack.c.0.s8 %v1350
    %v1352 = vlaneseq
    %v1353 = vshrl.u32 %v1352, 7
    %v1354 = vsub.s32 %v1351, %v1353
    %v1355 = vrot.slane %v1347, %v1354
    %v1357 = vunpack.c.l.s4 1966171168
    %v1358 = vunpack.c.0.s8 %v1357
    %v1359 = vlaneseq
    %v1360 = vshrl.u32 %v1359, 7
    %v1361 = vsub.s32 %v1358, %v1360
    %v1362 = vrot.slane %v1348, %v1361
    %v1363 = vcombine.high %v1355, %v1355
    %v1364 = vcombine.high %v1362, %v1362
    %1369 = vmatprep.subr.bf16.mxu0 %v1327
    %1370 = vmatpush1.bf16.xpose.msra.mxu0 %v1326
    %1371 = vmatprep.subr.bf16.mxu0 0
    %1372 = vmatpush1.bf16.xpose.msra.mxu0 0
    %1373 = vmatprep.subr.bf16.mxu0 0
    %1374 = vmatpush1.bf16.xpose.msra.mxu0 0
    %1375 = vmatprep.subr.bf16.mxu0 0
    %1376 = vmatpush1.bf16.xpose.msra.mxu0 0
    %1377 = vmatprep.subr.bf16.mxu0 0
    %1378 = vmatpush1.bf16.xpose.msra.mxu0 0
    %1379 = vmatprep.subr.bf16.mxu0 0
    %1380 = vmatpush1.bf16.xpose.msra.mxu0 0
    %1381 = vmatprep.subr.bf16.mxu0 0
    %1382 = vmatpush1.bf16.xpose.msra.mxu0 0
    %1383 = vmatprep.subr.bf16.mxu0 0
    %1384 = vmatpush1.bf16.xpose.msra.mxu0 0
    %1385 = vmatprep.subr.bf16.mxu0 0
    %1386 = vmatpush1.bf16.xpose.msra.mxu0 0
    %1387 = vmatprep.subr.bf16.mxu0 0
    %1388 = vmatpush1.bf16.xpose.msra.mxu0 0
    %1389 = vmatprep.subr.bf16.mxu0 0
    %1390 = vmatpush1.bf16.xpose.msra.mxu0 0
    %1391 = vmatprep.subr.bf16.mxu0 0
    %1392 = vmatpush1.bf16.xpose.msra.mxu0 0
    %1393 = vmatprep.subr.bf16.mxu0 0
    %1394 = vmatpush1.bf16.xpose.msra.mxu0 0
    %1395 = vmatprep.subr.bf16.mxu0 0
    %1396 = vmatpush1.bf16.xpose.msra.mxu0 0
    %1397 = vmatprep.subr.bf16.mxu0 0
    %1398 = vmatpush1.bf16.xpose.msra.mxu0 0
    %1399 = vmatprep.subr.bf16.mxu0 0
    %1400 = vmatpush1.bf16.xpose.msra.mxu0 0
    %1401 = vmatprep.mubr.bf16.mxu0 %v1362
    %1402 = vmatmul.mubr.bf16.gmra.mrb[0].mxu0 %v1355
    %v1403 = vpop.f32.mrb[0].mxu0
    %v1404 = vadd.f32 %v1339, %v1403
    %v1405 = vpop.f32.mrb[0].mxu0
    %v1406 = vpop.f32.mrb[0].mxu0
    %v1407 = vpop.f32.mrb[0].mxu0
    %1408 = vdwg.mxu0
    %1409 = vmatprep.subr.bf16.mxu0 %v1329
    %1410 = vmatpush1.bf16.xpose.msra.mxu0 %v1328
    %1411 = vmatprep.subr.bf16.mxu0 0
    %1412 = vmatpush1.bf16.xpose.msra.mxu0 0
    %1413 = vmatprep.subr.bf16.mxu0 0
    %1414 = vmatpush1.bf16.xpose.msra.mxu0 0
    %1415 = vmatprep.subr.bf16.mxu0 0
    %1416 = vmatpush1.bf16.xpose.msra.mxu0 0
    %1417 = vmatprep.subr.bf16.mxu0 0
    %1418 = vmatpush1.bf16.xpose.msra.mxu0 0
    %1419 = vmatprep.subr.bf16.mxu0 0
    %1420 = vmatpush1.bf16.xpose.msra.mxu0 0
    %1421 = vmatprep.subr.bf16.mxu0 0
    %1422 = vmatpush1.bf16.xpose.msra.mxu0 0
    %1423 = vmatprep.subr.bf16.mxu0 0
    %1424 = vmatpush1.bf16.xpose.msra.mxu0 0
    %1425 = vmatprep.subr.bf16.mxu0 0
    %1426 = vmatpush1.bf16.xpose.msra.mxu0 0
    %1427 = vmatprep.subr.bf16.mxu0 0
    %1428 = vmatpush1.bf16.xpose.msra.mxu0 0
    %1429 = vmatprep.subr.bf16.mxu0 0
    %1430 = vmatpush1.bf16.xpose.msra.mxu0 0
    %1431 = vmatprep.subr.bf16.mxu0 0
    %1432 = vmatpush1.bf16.xpose.msra.mxu0 0
    %1433 = vmatprep.subr.bf16.mxu0 0
    %1434 = vmatpush1.bf16.xpose.msra.mxu0 0
    %1435 = vmatprep.subr.bf16.mxu0 0
    %1436 = vmatpush1.bf16.xpose.msra.mxu0 0
    %1437 = vmatprep.subr.bf16.mxu0 0
    %1438 = vmatpush1.bf16.xpose.msra.mxu0 0
    %1439 = vmatprep.subr.bf16.mxu0 0
    %1440 = vmatpush1.bf16.xpose.msra.mxu0 0
    %1441 = vmatprep.mubr.bf16.mxu0 %v1364
    %1442 = vmatmul.mubr.bf16.gmra.mrb[0].mxu0 %v1363
    %v1443 = vpop.f32.mrb[0].mxu0
    %v1444 = vadd.f32 %v1404, %v1443
    %v1445 = vpop.f32.mrb[0].mxu0
    %v1446 = vpop.f32.mrb[0].mxu0
    %v1447 = vpop.f32.mrb[0].mxu0
    %1448 = vdwg.mxu0
    %v1449 = vxor.u32 %v1444, 2147483648
    %v1450 = vmul.f32 %v1449, 1.442695
    %v1451 = vpow.pop %v1450
    %v1452 = vadd.f32 %v1451, 1.0
    %v1453 = vrcp.pop %v1452
    %v1454 = vmul.f32 1.0, %v1453
    %vm1455 = vcmask 57344
    %1456 = vst.msk [vmem:[#allocation3] sm:$0x1] %vm1455, %v1454
    // Predicated region
    $region38: #{discriminator_forward.1} parent=1 // pred_check
      _
    $region39: #{discriminator_forward.1} parent=1 // pred_check_branch
      %1458 = sbr.rel (0) target = $region41
    $region40: #{discriminator_forward.1} parent=1 // pred_region
      %s1460 = ssub.s32 16, 16
      %1461 = vsyncadd [#allocation4], %s1460
      %s1463 = sshll.u32 [#allocation3], 4
      %s1464 = int_to_ptr.vmem [resolvable:$true] %s1463
      %1466 = dma.vmem_to_hbm [thread:$0]  %s1464, 16, %s9, [#allocation4]
    $region41: #{discriminator_forward.1} parent=1 // pred_fallthru
      _
    // Predicated region
    $region42: #{discriminator_forward.1} parent=1 // pred_check
      _
    $region43: #{discriminator_forward.1} parent=1 // pred_check_branch
      %1468 = sbr.rel (0) target = $region45
    $region44: #{discriminator_forward.1} parent=1 // pred_region
      %1469 = dma.done [#allocation4], 16
    $region45: #{discriminator_forward.1} parent=1 // pred_fallthru
      _
    %1470 = vsyncpa [#allocation4], 1

</llo_original>
